<compile_context>
chip_gen: v7x
topology: tpu7x:2x2x1
jax: 0.10.0
libtpu: 0.0.40
codegen_flags: <defaults>
</compile_context>

<pallas_src>
import functools

import jax
import jax.numpy as jnp
from jax.experimental import pallas as pl
from jax.experimental.pallas import tpu as pltpu


def gcn2_kernel(adj_ref, xk_ref, xi_ref, w_ref, b_ref, o_ref, *, tk, feed_resident):
    """One (i, k) grid step.

    adj_ref : (TM, TK) bf16   adjacency tile, rows i, cols k
    xk_ref  : (TK, F) or (N, F) bf16   feature feed for the k reduction
    xi_ref  : (TM, F)  f32    features for the residual (row tile i)
    w_ref   : (F, F)   bf16   weights (resident)
    b_ref   : (1, F)   f32    bias (resident)
    o_ref   : (TM, F)  f32    output row tile i; doubles as the accumulator
                              (block index constant across k -> stays in VMEM)
    """
    k = pl.program_id(1)

    @pl.when(k == 0)
    def _():
        o_ref[...] = jnp.zeros_like(o_ref)

    if feed_resident:
        start = pl.multiple_of(k * tk, tk)
        xk = xk_ref[pl.ds(start, tk), :]
    else:
        xk = xk_ref[...]

    # acc += adj[i, k-tile] @ x[k-tile]   (bf16 MXU inputs, f32 accumulation)
    o_ref[...] += jnp.dot(adj_ref[...], xk, preferred_element_type=jnp.float32)

    # Epilogue: single W matmul + bias + ReLU + residual, only on the last k.
    @pl.when(k == pl.num_programs(1) - 1)
    def _():
        agg = o_ref[...].astype(jnp.bfloat16)
        h = jnp.dot(agg, w_ref[...], preferred_element_type=jnp.float32)
        o_ref[...] = (jnp.maximum(h + b_ref[...], 0.0) + xi_ref[...]).astype(o_ref.dtype)


def _pick_tile(n, preferred, aligns):
    """Largest divisor of n that is <= preferred and a multiple of some align,
    trying aligns in order; falls back to n (full extent is always legal)."""
    preferred = min(preferred, n)
    for align in aligns:
        if n < align:
            continue
        t = preferred - preferred % align
        while t >= align:
            if n % t == 0:
                return t
            t -= align
    return n


def gcn2_forward(x, adj, w, b, *, tm=1024, tk=1024):
    """x:[N,F] f32, adj:[N,N] (pre-cast bf16 preferred), w:[F,F], b:[1,F] -> [N,F] f32."""
    N, F = x.shape
    assert adj.shape == (N, N) and w.shape == (F, F) and b.shape == (1, F)

    # Cap tm so the "parallel" row axis has >= 2 tiles (keeps both v7x TCs busy).
    tm_pref = max(8, min(tm, N // 2)) if N >= 16 else N
    tm = _pick_tile(N, tm_pref, (16, 8))      # sublane dim: 16-mult for bf16 packing
    tk = _pick_tile(N, tk, (128,))            # lane dim: must be 128-mult or full N
    grid = (N // tm, N // tk)

    # Adjacency should be cast/cached to bf16 once by the caller (it is reused
    # every layer in a GCN); only cast here as a fallback.
    adj_bf = adj if adj.dtype == jnp.bfloat16 else adj.astype(jnp.bfloat16)
    x_bf = x.astype(jnp.bfloat16)             # feed for adj @ x (small: N*F)
    w_bf = w.astype(jnp.bfloat16)
    b_f32 = b.astype(jnp.float32)

    # Keep the whole x feed resident in VMEM when it is small enough.
    feed_resident = 2 * N * F <= 8 * 1024 * 1024
    if feed_resident:
        feed_spec = pl.BlockSpec((N, F), lambda i, k: (0, 0))
        feed_bytes = 2 * N * F
    else:
        feed_spec = pl.BlockSpec((tk, F), lambda i, k: (k, 0))
        feed_bytes = 2 * N * F * grid[0]      # re-read per row tile

    cost = pl.CostEstimate(
        flops=2 * N * N * F + 2 * N * F * F,  # adj@x plus one W matmul
        transcendentals=0,
        bytes_accessed=2 * N * N              # adj (bf16), dominant stream
        + feed_bytes                          # x feed (bf16)
        + 4 * N * F                           # x residual (f32)
        + 2 * F * F + 4 * F                   # W, bias
        + 4 * N * F,                          # output
    )

    kernel = functools.partial(gcn2_kernel, tk=tk, feed_resident=feed_resident)

    return pl.pallas_call(
        kernel,
        out_shape=jax.ShapeDtypeStruct((N, F), x.dtype),
        grid_spec=pltpu.PrefetchScalarGridSpec(
            num_scalar_prefetch=0,
            grid=grid,
            in_specs=[
                pl.BlockSpec((tm, tk), lambda i, k: (i, k)),  # adj tile (bf16)
                feed_spec,                                    # x feed (bf16)
                pl.BlockSpec((tm, F), lambda i, k: (i, 0)),   # x residual (f32)
                pl.BlockSpec((F, F), lambda i, k: (0, 0)),    # W (resident)
                pl.BlockSpec((1, F), lambda i, k: (0, 0)),    # bias (resident)
            ],
            out_specs=pl.BlockSpec((tm, F), lambda i, k: (i, 0)),
        ),
        compiler_params=pltpu.CompilerParams(
            dimension_semantics=("parallel", "arbitrary"),
            # Safe on v7x (64 MiB physical); streaming path needs far less.
            vmem_limit_bytes=48 * 1024 * 1024,
        ),
        cost_estimate=cost,
    )(adj_bf, x_bf, x, w_bf, b_f32)


if __name__ == "__main__":
    # Small shapes consistent with the module: N nodes, F = n_in = n_out features.
    N, F = 512, 128
    key = jax.random.PRNGKey(0)
    kx, kadj, kw, kb = jax.random.split(key, 4)

    x = jax.random.normal(kx, (N, F), dtype=jnp.float32)

    # Symmetric, row-normalized dense adjacency (deterministic).
    a_raw = (jax.random.uniform(kadj, (N, N)) > 0.9).astype(jnp.float32)
    a_sym = jnp.maximum(a_raw, a_raw.T) + jnp.eye(N, dtype=jnp.float32)
    deg = jnp.sum(a_sym, axis=1, keepdims=True)
    adj = a_sym / deg

    # Pre-cast the adjacency once (the "cache across layers" pattern).
    adj_bf16 = adj.astype(jnp.bfloat16)

    # GraphConvolution parameter init (uniform(-stdv, stdv), stdv = 1/sqrt(F)).
    stdv = 1.0 / jnp.sqrt(jnp.float32(F))
    w = jax.random.uniform(kw, (F, F), minval=-stdv, maxval=stdv, dtype=jnp.float32)
    b = jax.random.uniform(kb, (1, F), minval=-stdv, maxval=stdv, dtype=jnp.float32)

    # tk=256 -> 2x2 grid at this size (exercises the tiled k reduction path);
    # tm default gets capped to N//2 = 256 so the row axis has 2 parallel tiles.
    out = gcn2_forward(x, adj_bf16, w, b, tk=256)
    out = jax.block_until_ready(out)

    # Pure-JAX f32 reference; tolerance loosened for bf16 MXU inputs.
    ref = jnp.maximum(adj @ (x @ w) + b, 0.0) + x
    assert jnp.allclose(out, ref, atol=3e-2, rtol=3e-2), "mismatch vs reference"

    print("KERNEL_OK")
</pallas_src>

<mosaic_0001>
module attributes {stable_mosaic.version = 11 : i64} {
  func.func @gcn2_kernel(%arg0: i32, %arg1: i32, %arg2: memref<256x256xbf16, #tpu.memory_space<vmem>>, %arg3: memref<512x128xbf16, #tpu.memory_space<vmem>>, %arg4: memref<256x128xf32, #tpu.memory_space<vmem>>, %arg5: memref<128x128xbf16, #tpu.memory_space<vmem>>, %arg6: memref<1x128xf32, #tpu.memory_space<vmem>>, %arg7: memref<256x128xf32, #tpu.memory_space<vmem>>) attributes {dimension_semantics = [#tpu.dimension_semantics<parallel>, #tpu.dimension_semantics<arbitrary>], iteration_bounds = array<i64: 2, 2>, scalar_prefetch = 0 : i64, scratch_operands = 0 : i64, tpu.core_type = #tpu.core_type<tc>, window_params = [{transform_indices = @transform_0, window_bounds = array<i64: 256, 256>}, {pipeline_mode = #tpu.pipeline_mode<synchronous>, transform_indices = @transform_1, window_bounds = array<i64: 512, 128>}, {transform_indices = @transform_2, window_bounds = array<i64: 256, 128>}, {pipeline_mode = #tpu.pipeline_mode<synchronous>, transform_indices = @transform_3, window_bounds = array<i64: 128, 128>}, {pipeline_mode = #tpu.pipeline_mode<synchronous>, transform_indices = @transform_4, window_bounds = array<i64: 1, 128>}, {transform_indices = @transform_5, window_bounds = array<i64: 256, 128>}]} {
    %c0_i32 = arith.constant 0 : i32
    %0 = arith.cmpi eq, %arg1, %c0_i32 : i32
    %1 = arith.extui %0 : i1 to i32
    %c0_i32_0 = arith.constant 0 : i32
    %2 = arith.cmpi ne, %1, %c0_i32_0 : i32
    scf.if %2 {
      %cst_8 = arith.constant 0.000000e+00 : f32
      %15 = vector.broadcast %cst_8 : f32 to vector<256x128xf32>
      %c0_9 = arith.constant 0 : index
      %c0_10 = arith.constant 0 : index
      %16 = vector.load %arg7[%c0_9, %c0_10] : memref<256x128xf32, #tpu.memory_space<vmem>>, vector<256x128xf32>
      tpu.vector_store %arg7[%c0_9, %c0_10], %15 {strides = array<i32>} : memref<256x128xf32, #tpu.memory_space<vmem>>, vector<256x128xf32>,
    } else {
    }
    %c256_i32 = arith.constant 256 : i32
    %3 = arith.muli %arg1, %c256_i32 : i32
    %4 = tpu.assume_multiple %3, 256 : i32
    %5 = arith.index_cast %4 : i32 to index
    %c0 = arith.constant 0 : index
    %6 = vector.load %arg3[%5, %c0] : memref<512x128xbf16, #tpu.memory_space<vmem>>, vector<256x128xbf16>
    %c0_1 = arith.constant 0 : index
    %c0_2 = arith.constant 0 : index
    %7 = vector.load %arg7[%c0_1, %c0_2] : memref<256x128xf32, #tpu.memory_space<vmem>>, vector<256x128xf32>
    %c0_3 = arith.constant 0 : index
    %c0_4 = arith.constant 0 : index
    %8 = vector.load %arg2[%c0_3, %c0_4] : memref<256x256xbf16, #tpu.memory_space<vmem>>, vector<256x256xbf16>
    %cst = arith.constant dense<0.000000e+00> : vector<256x128xf32>
    %9 = tpu.matmul %8, %6, %cst {dimension_numbers = #tpu.dot_dimension_numbers<[1], [0], [0], [1], [0, 0, 1, 1], [], []>} : vector<256x256xbf16>, vector<256x128xbf16>, vector<256x128xf32> -> vector<256x128xf32>
    %10 = arith.addf %7, %9 : vector<256x128xf32>
    %c0_5 = arith.constant 0 : index
    %c0_6 = arith.constant 0 : index
    %11 = vector.load %arg7[%c0_5, %c0_6] : memref<256x128xf32, #tpu.memory_space<vmem>>, vector<256x128xf32>
    tpu.vector_store %arg7[%c0_5, %c0_6], %10 {strides = array<i32>} : memref<256x128xf32, #tpu.memory_space<vmem>>, vector<256x128xf32>,
    %c1_i32 = arith.constant 1 : i32
    %12 = arith.cmpi eq, %arg1, %c1_i32 : i32
    %13 = arith.extui %12 : i1 to i32
    %c0_i32_7 = arith.constant 0 : i32
    %14 = arith.cmpi ne, %13, %c0_i32_7 : i32
    scf.if %14 {
      %c0_8 = arith.constant 0 : index
      %c0_9 = arith.constant 0 : index
      %15 = vector.load %arg7[%c0_8, %c0_9] : memref<256x128xf32, #tpu.memory_space<vmem>>, vector<256x128xf32>
      %16 = arith.truncf %15 : vector<256x128xf32> to vector<256x128xbf16>
      %c0_10 = arith.constant 0 : index
      %c0_11 = arith.constant 0 : index
      %17 = vector.load %arg5[%c0_10, %c0_11] : memref<128x128xbf16, #tpu.memory_space<vmem>>, vector<128x128xbf16>
      %cst_12 = arith.constant dense<0.000000e+00> : vector<256x128xf32>
      %18 = tpu.matmul %16, %17, %cst_12 {dimension_numbers = #tpu.dot_dimension_numbers<[1], [0], [0], [1], [0, 0, 1, 1], [], []>} : vector<256x128xbf16>, vector<128x128xbf16>, vector<256x128xf32> -> vector<256x128xf32>
      %c0_13 = arith.constant 0 : index
      %c0_14 = arith.constant 0 : index
      %19 = vector.load %arg6[%c0_13, %c0_14] : memref<1x128xf32, #tpu.memory_space<vmem>>, vector<1x128xf32>
      %20 = vector.broadcast %19 : vector<1x128xf32> to vector<256x128xf32>
      %21 = arith.addf %18, %20 : vector<256x128xf32>
      %cst_15 = arith.constant 0.000000e+00 : f32
      %22 = vector.broadcast %cst_15 : f32 to vector<256x128xf32>
      %23 = arith.maximumf %21, %22 : vector<256x128xf32>
      %c0_16 = arith.constant 0 : index
      %c0_17 = arith.constant 0 : index
      %24 = vector.load %arg4[%c0_16, %c0_17] : memref<256x128xf32, #tpu.memory_space<vmem>>, vector<256x128xf32>
      %25 = arith.addf %23, %24 : vector<256x128xf32>
      %c0_18 = arith.constant 0 : index
      %c0_19 = arith.constant 0 : index
      %26 = vector.load %arg7[%c0_18, %c0_19] : memref<256x128xf32, #tpu.memory_space<vmem>>, vector<256x128xf32>
      tpu.vector_store %arg7[%c0_18, %c0_19], %25 {strides = array<i32>} : memref<256x128xf32, #tpu.memory_space<vmem>>, vector<256x128xf32>,
    } else {
    }
    return
  }
  func.func @transform_0(%arg0: i32, %arg1: i32) -> (i32, i32) {
    %c0_i32 = arith.constant 0 : i32
    return %arg0, %arg1 : i32, i32
  }
  func.func @transform_1(%arg0: i32, %arg1: i32) -> (i32, i32) {
    %c0_i32 = arith.constant 0 : i32
    %c0_i32_0 = arith.constant 0 : i32
    %c0_i32_1 = arith.constant 0 : i32
    return %c0_i32, %c0_i32_0 : i32, i32
  }
  func.func @transform_2(%arg0: i32, %arg1: i32) -> (i32, i32) {
    %c0_i32 = arith.constant 0 : i32
    %c0_i32_0 = arith.constant 0 : i32
    return %arg0, %c0_i32 : i32, i32
  }
  func.func @transform_3(%arg0: i32, %arg1: i32) -> (i32, i32) {
    %c0_i32 = arith.constant 0 : i32
    %c0_i32_0 = arith.constant 0 : i32
    %c0_i32_1 = arith.constant 0 : i32
    return %c0_i32, %c0_i32_0 : i32, i32
  }
  func.func @transform_4(%arg0: i32, %arg1: i32) -> (i32, i32) {
    %c0_i32 = arith.constant 0 : i32
    %c0_i32_0 = arith.constant 0 : i32
    %c0_i32_1 = arith.constant 0 : i32
    return %c0_i32, %c0_i32_0 : i32, i32
  }
  func.func @transform_5(%arg0: i32, %arg1: i32) -> (i32, i32) {
    %c0_i32 = arith.constant 0 : i32
    %c0_i32_0 = arith.constant 0 : i32
    return %arg0, %c0_i32 : i32, i32
  }
}

</mosaic_0001>

<llo_original>
// kernel: tpu_custom_call.1
$region0: #{tpu_custom_call.1}
  #allocation0 [shape = 'u32[]', space=smem, size = 0x4, offset = 0x4, fixed_abs, tag = 'smem constant byte address 0x4 - core index']
  #allocation1 [shape = 'u32[144,128]{1,0:T(1,128)}', space=vmem, size = 0x12000, scoped, tag = 'internal scratch']
  %s0 = inlined_call_operand.hbm [shape: bf16[512,512], index: 0, kind: input, shape index: {}]
  %s1 = inlined_call_operand.hbm [shape: bf16[512,128], index: 1, kind: input, shape index: {}]
  %s2 = inlined_call_operand.hbm [shape: f32[512,128], index: 2, kind: input, shape index: {}]
  %s3 = inlined_call_operand.hbm [shape: bf16[128,128], index: 3, kind: input, shape index: {}]
  %s4 = inlined_call_operand.vmem [shape: f32[1,128], index: 4, kind: input, shape index: {}]
  %s5 = inlined_call_operand.hbm [shape: f32[512,128], index: 5, kind: output, shape index: {}]
  %s6 = sld [smem:[#allocation0]]
  $region77: #{tpu_custom_call.1} parent=0
    _
  %s8 = ssub.s32 1, %s6
  %s9 = scalar_select 0, %s8, %s6
  $region1: #{tpu_custom_call.1} parent=0
    #allocation2 [shape = 'u8[262144]{0}', space=vmem, size = 0x40000, scoped, tag = 'input window, operand 0']
    #allocation3 [shape = 's32[2]{0}', space=sflag, size = 0x8, scoped, tag = 'scoped memory for tpu_custom_call.1']
    #allocation4 [shape = 's32[2]{0}', space=sflag, size = 0x8, scoped, tag = 'scoped memory for tpu_custom_call.1']
    #allocation5 [shape = 'u8[131072]{0}', space=vmem, size = 0x20000, scoped, tag = 'input window, operand 1, single buffered']
    #allocation6 [shape = 's32[1]{0}', space=sflag, size = 0x4, scoped, tag = 'scoped memory for tpu_custom_call.1']
    #allocation7 [shape = 'u8[262144]{0}', space=vmem, size = 0x40000, scoped, tag = 'input window, operand 2']
    #allocation8 [shape = 'u8[32768]{0}', space=vmem, size = 0x8000, scoped, tag = 'input window, operand 3, single buffered']
    #allocation9 [shape = 'u8[262144]{0}', space=vmem, size = 0x40000, scoped, tag = 'output window, operand 0']
    %10 = vsyncpa [#allocation3], 0
    %s11 = scalar_lea.sflag [#allocation3], 1
    %12 = vsyncpa %s11, 0
    %13 = vsyncpa [#allocation6], 0
    %14 = vsyncpa [#allocation4], 0
    %s15 = scalar_lea.sflag [#allocation4], 1
    %16 = vsyncpa %s15, 0
    loop: start=0, step=1, limit=6
    $region2: #{tpu_custom_call.1} parent=1 // loop_pre_header
      _
    $region3: #{tpu_custom_call.1} parent=1 // loop_header
      %s18 = sphi 0, %s22
      %p19 = scmp.ge.s32.totalorder %s18, 6
      %s25 = sphi 0, %s37
      %s26 = sphi 0, %s33
      %s27 = sphi 0, %s25
      %s28 = sphi 0, %s26
      %s29 = sphi 0, %s27
      %s30 = sphi 0, %s28
      %s42 = sphi 0, %s44
      %s45 = sphi 0, %s42
      %s46 = sphi 0, %s45
      %s62 = sphi 0, %s46
      %s66 = sphi 0, %s66
      %s68 = sphi 0, %s66
      %s69 = sphi 0, %s68
      %s83 = sphi 0, %s69
      %s89 = sphi 0, %s91
      %s92 = sphi 0, %s89
      %s93 = sphi 0, %s92
      %s109 = sphi 0, %s93
      %s113 = sphi 0, %s113
      %s115 = sphi 0, %s113
      %s116 = sphi 0, %s115
      %s130 = sphi 0, %s116
      %s134 = sphi 0, %s134
      %s136 = sphi 0, %s134
      %s137 = sphi 0, %s136
      %s151 = sphi 0, %s137
      %s157 = sphi 0, %s159
      %s160 = sphi 0, %s157
      %s161 = sphi 0, %s160
      %s177 = sphi 0, %s161
    $region4: #{tpu_custom_call.1} parent=1 // loop_header_branch
      %21 = sbr.rel (%p19) target = $region8
    $region5: #{tpu_custom_call.1} parent=1 // loop_body
      %s23 = ssub.s32 %s18, 1
      %s24 = ssub.s32 %s18, 2
      %s31 = sadd.s32 1, %s26
      %p32 = scmp.ge.s32.totalorder %s31, 2
      %s33 = scalar_select %p32, 0, %s31
      %s34 = sadd.s32 1, %s25
      %s35 = scalar_select %p32, %s34, %s25
      %p36 = scmp.ge.s32.totalorder %s35, 2
      %s37 = scalar_select %p36, 0, %s35
      %s38 = ssub.s32 %s25, %s37
      %s39 = ssub.s32 %s26, %s33
      %s40 = sor.u32 %s38, %s39
      %p41 = scmp.eq.s32.totalorder %s40, 0
      %s43 = sadd.s32 %s42, 1
      %s44 = scalar_select %p41, %s42, %s43
      %p47 = pneg %p41
      %p48 = scmp.eq.s32.totalorder %s18, 3
      %p49 = por %p47, %p48
      %p50 = scmp.ne.s32.totalorder %s42, %s45
      %p51 = scmp.eq.s32.totalorder %s18, 0
      %p52 = por %p50, %p51
      %p53 = scmp.ne.s32.totalorder %s42, %s45
      %p54 = scmp.eq.s32.totalorder %s23, 3
      %p55 = por %p53, %p54
      %p56 = scmp.ne.s32.totalorder %s45, %s46
      %p57 = scmp.eq.s32.totalorder %s23, 0
      %p58 = por %p56, %p57
      %p59 = scmp.ne.s32.totalorder %s45, %s46
      %p60 = scmp.eq.s32.totalorder %s24, 3
      %p61 = por %p59, %p60
      %p63 = scmp.ne.s32.totalorder %s46, %s62
      %p64 = scmp.eq.s32.totalorder %s24, 0
      %p65 = por %p63, %p64
      %s67 = sadd.s32 %s66, 1
      %p70 = scmp.eq.s32.totalorder %s18, 3
      %p71 = scmp.ne.s32.totalorder %s66, %s68
      %p72 = scmp.eq.s32.totalorder %s18, 0
      %p73 = por %p71, %p72
      %p74 = scmp.ne.s32.totalorder %s66, %s68
      %p75 = scmp.eq.s32.totalorder %s23, 3
      %p76 = por %p74, %p75
      %p77 = scmp.ne.s32.totalorder %s68, %s69
      %p78 = scmp.eq.s32.totalorder %s23, 0
      %p79 = por %p77, %p78
      %p80 = scmp.ne.s32.totalorder %s68, %s69
      %p81 = scmp.eq.s32.totalorder %s24, 3
      %p82 = por %p80, %p81
      %p84 = scmp.ne.s32.totalorder %s69, %s83
      %p85 = scmp.eq.s32.totalorder %s24, 0
      %p86 = por %p84, %p85
      %s87 = ssub.s32 %s25, %s37
      %p88 = scmp.eq.s32.totalorder %s87, 0
      %s90 = sadd.s32 %s89, 1
      %s91 = scalar_select %p88, %s89, %s90
      %p94 = pneg %p88
      %p95 = scmp.eq.s32.totalorder %s18, 3
      %p96 = por %p94, %p95
      %p97 = scmp.ne.s32.totalorder %s89, %s92
      %p98 = scmp.eq.s32.totalorder %s18, 0
      %p99 = por %p97, %p98
      %p100 = scmp.ne.s32.totalorder %s89, %s92
      %p101 = scmp.eq.s32.totalorder %s23, 3
      %p102 = por %p100, %p101
      %p103 = scmp.ne.s32.totalorder %s92, %s93
      %p104 = scmp.eq.s32.totalorder %s23, 0
      %p105 = por %p103, %p104
      %p106 = scmp.ne.s32.totalorder %s92, %s93
      %p107 = scmp.eq.s32.totalorder %s24, 3
      %p108 = por %p106, %p107
      %p110 = scmp.ne.s32.totalorder %s93, %s109
      %p111 = scmp.eq.s32.totalorder %s24, 0
      %p112 = por %p110, %p111
      %s114 = sadd.s32 %s113, 1
      %p117 = scmp.eq.s32.totalorder %s18, 3
      %p118 = scmp.ne.s32.totalorder %s113, %s115
      %p119 = scmp.eq.s32.totalorder %s18, 0
      %p120 = por %p118, %p119
      %p121 = scmp.ne.s32.totalorder %s113, %s115
      %p122 = scmp.eq.s32.totalorder %s23, 3
      %p123 = por %p121, %p122
      %p124 = scmp.ne.s32.totalorder %s115, %s116
      %p125 = scmp.eq.s32.totalorder %s23, 0
      %p126 = por %p124, %p125
      %p127 = scmp.ne.s32.totalorder %s115, %s116
      %p128 = scmp.eq.s32.totalorder %s24, 3
      %p129 = por %p127, %p128
      %p131 = scmp.ne.s32.totalorder %s116, %s130
      %p132 = scmp.eq.s32.totalorder %s24, 0
      %p133 = por %p131, %p132
      %s135 = sadd.s32 %s134, 1
      %p138 = scmp.eq.s32.totalorder %s18, 3
      %p139 = scmp.ne.s32.totalorder %s134, %s136
      %p140 = scmp.eq.s32.totalorder %s18, 0
      %p141 = por %p139, %p140
      %p142 = scmp.ne.s32.totalorder %s134, %s136
      %p143 = scmp.eq.s32.totalorder %s23, 3
      %p144 = por %p142, %p143
      %p145 = scmp.ne.s32.totalorder %s136, %s137
      %p146 = scmp.eq.s32.totalorder %s23, 0
      %p147 = por %p145, %p146
      %p148 = scmp.ne.s32.totalorder %s136, %s137
      %p149 = scmp.eq.s32.totalorder %s24, 3
      %p150 = por %p148, %p149
      %p152 = scmp.ne.s32.totalorder %s137, %s151
      %p153 = scmp.eq.s32.totalorder %s24, 0
      %p154 = por %p152, %p153
      %s155 = ssub.s32 %s25, %s37
      %p156 = scmp.eq.s32.totalorder %s155, 0
      %s158 = sadd.s32 %s157, 1
      %s159 = scalar_select %p156, %s157, %s158
      %p162 = pneg %p156
      %p163 = scmp.eq.s32.totalorder %s18, 3
      %p164 = por %p162, %p163
      %p165 = scmp.ne.s32.totalorder %s157, %s160
      %p166 = scmp.eq.s32.totalorder %s18, 0
      %p167 = por %p165, %p166
      %p168 = scmp.ne.s32.totalorder %s157, %s160
      %p169 = scmp.eq.s32.totalorder %s23, 3
      %p170 = por %p168, %p169
      %p171 = scmp.ne.s32.totalorder %s160, %s161
      %p172 = scmp.eq.s32.totalorder %s23, 0
      %p173 = por %p171, %p172
      %p174 = scmp.ne.s32.totalorder %s160, %s161
      %p175 = scmp.eq.s32.totalorder %s24, 3
      %p176 = por %p174, %p175
      %p178 = scmp.ne.s32.totalorder %s161, %s177
      %p179 = scmp.eq.s32.totalorder %s24, 0
      %p180 = por %p178, %p179
      %p181 = scmp.le.s32.totalorder 1, %s18
      %p182 = scmp.lt.s32.totalorder %s18, 5
      %p183 = pnand %p181, %p182
      %p184 = pneg %p183
      // Predicated region
      $region9: #{tpu_custom_call.1} parent=5 // pred_check
        _
      $region10: #{tpu_custom_call.1} parent=5 // pred_check_branch
        %186 = sbr.rel (%p183) target = $region12
      $region11: #{tpu_custom_call.1} parent=5 // pred_region
        %s187 = ssub.s32 %s18, 1
        // Predicated region
        $region13: #{tpu_custom_call.1} parent=11 // pred_check
          %p188 = pneg %p79
        $region14: #{tpu_custom_call.1} parent=11 // pred_check_branch
          %190 = sbr.rel (%p188) target = $region16
        $region15: #{tpu_custom_call.1} parent=11 // pred_region
          %s192 = ssub.s32 4096, 4096
          %193 = vsyncadd [#allocation6], %s192
          %s194 = sshll.u32 [#allocation5], 4
          %s195 = int_to_ptr.vmem [resolvable:$true] %s194
          %200 = dma.hbm_to_vmem [thread:$0]  %s1, 4096, %s195, [#allocation6], 64, 64, 4
        $region16: #{tpu_custom_call.1} parent=11 // pred_fallthru
          _
        // Predicated region
        $region17: #{tpu_custom_call.1} parent=11 // pred_check
          %p201 = pneg %p126
        $region18: #{tpu_custom_call.1} parent=11 // pred_check_branch
          %203 = sbr.rel (%p201) target = $region20
        $region19: #{tpu_custom_call.1} parent=11 // pred_region
          %s205 = ssub.s32 1024, 1024
          %206 = vsyncadd [#allocation6], %s205
          %s207 = sshll.u32 [#allocation8], 4
          %s208 = int_to_ptr.vmem [resolvable:$true] %s207
          %213 = dma.hbm_to_vmem [thread:$0]  %s3, 1024, %s208, [#allocation6], 64, 64, 4
        $region20: #{tpu_custom_call.1} parent=11 // pred_fallthru
          _
        // Predicated region
        $region21: #{tpu_custom_call.1} parent=11 // pred_check
          %p214 = pneg %p147
        $region22: #{tpu_custom_call.1} parent=11 // pred_check_branch
          %216 = sbr.rel (%p214) target = $region24
        $region23: #{tpu_custom_call.1} parent=11 // pred_region
          _
        $region24: #{tpu_custom_call.1} parent=11 // pred_fallthru
          _
      $region12: #{tpu_custom_call.1} parent=5 // pred_fallthru
        _
      %p217 = scmp.lt.s32.totalorder %s18, 4
      // Predicated region
      $region25: #{tpu_custom_call.1} parent=5 // pred_check
        %p218 = pneg %p217
      $region26: #{tpu_custom_call.1} parent=5 // pred_check_branch
        %220 = sbr.rel (%p218) target = $region28
      $region27: #{tpu_custom_call.1} parent=5 // pred_region
        // Predicated region
        $region29: #{tpu_custom_call.1} parent=27 // pred_check
          %p221 = pneg %p52
        $region30: #{tpu_custom_call.1} parent=27 // pred_check_branch
          %223 = sbr.rel (%p221) target = $region32
        $region31: #{tpu_custom_call.1} parent=27 // pred_region
          %s224 = sand.u32 %s18, 1
          %s225 = scalar_lea.sflag [#allocation3], %s224
          %s226 = sand.u32 %s42, 1
          %s227 = smul.addr %s226, 256
          %s228 = scalar_lea.vmem [#allocation2], %s227
          %s229 = smul.u32 32, %s25
          %s230 = smul.u32 2, %s26
          %s232 = ssub.s32 4096, 4096
          %233 = vsyncadd %s225, %s232
          %s234 = smul.addr %s229, 4
          %s235 = sadd.s32 %s230, %s234
          %s236 = smul.addr %s235, 64
          %s237 = scalar_lea.hbm %s0, %s236
          %s238 = sshll.u32 %s228, 4
          %s239 = int_to_ptr.vmem [resolvable:$true] %s238
          %244 = dma.hbm_to_vmem [thread:$0]  %s237, 4096, %s239, %s225, 256, 128, 8
        $region32: #{tpu_custom_call.1} parent=27 // pred_fallthru
          _
        // Predicated region
        $region33: #{tpu_custom_call.1} parent=27 // pred_check
          %p245 = pneg %p99
        $region34: #{tpu_custom_call.1} parent=27 // pred_check_branch
          %247 = sbr.rel (%p245) target = $region36
        $region35: #{tpu_custom_call.1} parent=27 // pred_region
          %s248 = sand.u32 %s18, 1
          %s249 = scalar_lea.sflag [#allocation3], %s248
          %s250 = sand.u32 %s89, 1
          %s251 = smul.addr %s250, 256
          %s252 = scalar_lea.vmem [#allocation7], %s251
          %s253 = smul.u32 32, %s25
          %s255 = ssub.s32 4096, 4096
          %256 = vsyncadd %s249, %s255
          %s257 = smul.addr %s253, 128
          %s258 = scalar_lea.hbm %s2, %s257
          %s259 = sshll.u32 %s252, 4
          %s260 = int_to_ptr.vmem [resolvable:$true] %s259
          %265 = dma.hbm_to_vmem [thread:$0]  %s258, 4096, %s260, %s249, 128, 128, 8
        $region36: #{tpu_custom_call.1} parent=27 // pred_fallthru
          _
      $region28: #{tpu_custom_call.1} parent=5 // pred_fallthru
        _
      %p266 = scmp.le.s32.totalorder 1, %s18
      %p267 = scmp.lt.s32.totalorder %s18, 5
      %p268 = pnand %p266, %p267
      %p269 = pneg %p268
      // Predicated region
      $region37: #{tpu_custom_call.1} parent=5 // pred_check
        _
      $region38: #{tpu_custom_call.1} parent=5 // pred_check_branch
        %271 = sbr.rel (%p268) target = $region40
      $region39: #{tpu_custom_call.1} parent=5 // pred_region
        %s272 = ssub.s32 %s18, 1
        %s273 = sand.u32 %s23, 1
        %s274 = scalar_lea.sflag [#allocation3], %s273
        %s275 = sand.u32 %s45, 1
        %s276 = smul.addr %s275, 256
        %s277 = scalar_lea.vmem [#allocation2], %s276
        // Predicated region
        $region41: #{tpu_custom_call.1} parent=39 // pred_check
          %p278 = pneg %p58
        $region42: #{tpu_custom_call.1} parent=39 // pred_check_branch
          %280 = sbr.rel (%p278) target = $region44
        $region43: #{tpu_custom_call.1} parent=39 // pred_region
          %281 = dma.done %s274, 4096
        $region44: #{tpu_custom_call.1} parent=39 // pred_fallthru
          _
        // Predicated region
        $region45: #{tpu_custom_call.1} parent=39 // pred_check
          %p282 = pneg %p79
        $region46: #{tpu_custom_call.1} parent=39 // pred_check_branch
          %284 = sbr.rel (%p282) target = $region48
        $region47: #{tpu_custom_call.1} parent=39 // pred_region
          %285 = dma.done [#allocation6], 4096
        $region48: #{tpu_custom_call.1} parent=39 // pred_fallthru
          _
        %s286 = sand.u32 %s23, 1
        %s287 = scalar_lea.sflag [#allocation3], %s286
        %s288 = sand.u32 %s92, 1
        %s289 = smul.addr %s288, 256
        %s290 = scalar_lea.vmem [#allocation7], %s289
        // Predicated region
        $region49: #{tpu_custom_call.1} parent=39 // pred_check
          %p291 = pneg %p105
        $region50: #{tpu_custom_call.1} parent=39 // pred_check_branch
          %293 = sbr.rel (%p291) target = $region52
        $region51: #{tpu_custom_call.1} parent=39 // pred_region
          %294 = dma.done %s287, 4096
        $region52: #{tpu_custom_call.1} parent=39 // pred_fallthru
          _
        // Predicated region
        $region53: #{tpu_custom_call.1} parent=39 // pred_check
          %p295 = pneg %p126
        $region54: #{tpu_custom_call.1} parent=39 // pred_check_branch
          %297 = sbr.rel (%p295) target = $region56
        $region55: #{tpu_custom_call.1} parent=39 // pred_region
          %298 = dma.done [#allocation6], 1024
        $region56: #{tpu_custom_call.1} parent=39 // pred_fallthru
          _
        %s299 = sand.u32 %s23, 1
        %s300 = scalar_lea.sflag [#allocation3], %s299
        %s301 = sand.u32 %s45, 1
        %s302 = smul.addr %s301, 256
        %s303 = scalar_lea.vmem [#allocation2], %s302
        %p304 = pneg %p58
        %p305 = pneg %p55
        %p306 = pneg %p79
        %p307 = pneg %p76
        %s308 = sand.u32 %s23, 1
        %s309 = scalar_lea.sflag [#allocation3], %s308
        %s310 = sand.u32 %s92, 1
        %s311 = smul.addr %s310, 256
        %s312 = scalar_lea.vmem [#allocation7], %s311
        %p313 = pneg %p105
        %p314 = pneg %p102
        %p315 = pneg %p126
        %p316 = pneg %p123
        %p317 = pneg %p147
        %p318 = pneg %p144
        %p319 = pneg %p173
        %p320 = pneg %p170
        %s321 = sand.u32 %s160, 1
        %s322 = scalar_lea.sflag [#allocation4], %s321
        %s323 = sand.u32 %s160, 1
        %s324 = smul.addr %s323, 256
        %s325 = scalar_lea.vmem [#allocation9], %s324
        %s326 = smul.u32 32, %s27
        %s327 = smul.u32 2, %s28
        %s328 = smul.u32 32, %s27
        %s329 = smul.u32 32, %s27
        %p331 = scmp.eq.s32.totalorder %s28, 0
        // Predicated region
        $region57: #{tpu_custom_call.1} parent=39 // pred_check
          %p332 = pneg %p331
        $region58: #{tpu_custom_call.1} parent=39 // pred_check_branch
          %334 = sbr.rel (%p332) target = $region60
        $region59: #{tpu_custom_call.1} parent=39 // pred_region
          %335 = vst [vmem:[%s325] sm:$0xff] 0.0
          %336 = vst [vmem:[%s325 + $0x8] sm:$0xff] 0.0
          %337 = vst [vmem:[%s325 + $0x10] sm:$0xff] 0.0
          %338 = vst [vmem:[%s325 + $0x18] sm:$0xff] 0.0
          %339 = vst [vmem:[%s325 + $0x20] sm:$0xff] 0.0
          %340 = vst [vmem:[%s325 + $0x28] sm:$0xff] 0.0
          %341 = vst [vmem:[%s325 + $0x30] sm:$0xff] 0.0
          %342 = vst [vmem:[%s325 + $0x38] sm:$0xff] 0.0
          %343 = vst [vmem:[%s325 + $0x40] sm:$0xff] 0.0
          %344 = vst [vmem:[%s325 + $0x48] sm:$0xff] 0.0
          %345 = vst [vmem:[%s325 + $0x50] sm:$0xff] 0.0
          %346 = vst [vmem:[%s325 + $0x58] sm:$0xff] 0.0
          %347 = vst [vmem:[%s325 + $0x60] sm:$0xff] 0.0
          %348 = vst [vmem:[%s325 + $0x68] sm:$0xff] 0.0
          %349 = vst [vmem:[%s325 + $0x70] sm:$0xff] 0.0
          %350 = vst [vmem:[%s325 + $0x78] sm:$0xff] 0.0
          %351 = vst [vmem:[%s325 + $0x80] sm:$0xff] 0.0
          %352 = vst [vmem:[%s325 + $0x88] sm:$0xff] 0.0
          %353 = vst [vmem:[%s325 + $0x90] sm:$0xff] 0.0
          %354 = vst [vmem:[%s325 + $0x98] sm:$0xff] 0.0
          %355 = vst [vmem:[%s325 + $0xa0] sm:$0xff] 0.0
          %356 = vst [vmem:[%s325 + $0xa8] sm:$0xff] 0.0
          %357 = vst [vmem:[%s325 + $0xb0] sm:$0xff] 0.0
          %358 = vst [vmem:[%s325 + $0xb8] sm:$0xff] 0.0
          %359 = vst [vmem:[%s325 + $0xc0] sm:$0xff] 0.0
          %360 = vst [vmem:[%s325 + $0xc8] sm:$0xff] 0.0
          %361 = vst [vmem:[%s325 + $0xd0] sm:$0xff] 0.0
          %362 = vst [vmem:[%s325 + $0xd8] sm:$0xff] 0.0
          %363 = vst [vmem:[%s325 + $0xe0] sm:$0xff] 0.0
          %364 = vst [vmem:[%s325 + $0xe8] sm:$0xff] 0.0
          %365 = vst [vmem:[%s325 + $0xf0] sm:$0xff] 0.0
          %366 = vst [vmem:[%s325 + $0xf8] sm:$0xff] 0.0
        $region60: #{tpu_custom_call.1} parent=39 // pred_fallthru
          _
        %s367 = smul.u32 %s28, 256
        %s368 = sshra.s32 %s367, 3
        %s369 = sand.u32 %s367, 7
        %s370 = smul.addr %s368, 4
        %s371 = scalar_lea.vmem [#allocation5], %s370
        %v372 = vld [vmem:[%s371] sm:$0xf]
        %v373 = vld [vmem:[%s371 + $0x4] sm:$0xf]
        %v374 = vld [vmem:[%s371 + $0x8] sm:$0xf]
        %v375 = vld [vmem:[%s371 + $0xc] sm:$0xf]
        %v376 = vld [vmem:[%s371 + $0x10] sm:$0xf]
        %v377 = vld [vmem:[%s371 + $0x14] sm:$0xf]
        %v378 = vld [vmem:[%s371 + $0x18] sm:$0xf]
        %v379 = vld [vmem:[%s371 + $0x1c] sm:$0xf]
        %v380 = vld [vmem:[%s371 + $0x20] sm:$0xf]
        %v381 = vld [vmem:[%s371 + $0x24] sm:$0xf]
        %v382 = vld [vmem:[%s371 + $0x28] sm:$0xf]
        %v383 = vld [vmem:[%s371 + $0x2c] sm:$0xf]
        %v384 = vld [vmem:[%s371 + $0x30] sm:$0xf]
        %v385 = vld [vmem:[%s371 + $0x34] sm:$0xf]
        %v386 = vld [vmem:[%s371 + $0x38] sm:$0xf]
        %v387 = vld [vmem:[%s371 + $0x3c] sm:$0xf]
        %v388 = vld [vmem:[%s371 + $0x40] sm:$0xf]
        %v389 = vld [vmem:[%s371 + $0x44] sm:$0xf]
        %v390 = vld [vmem:[%s371 + $0x48] sm:$0xf]
        %v391 = vld [vmem:[%s371 + $0x4c] sm:$0xf]
        %v392 = vld [vmem:[%s371 + $0x50] sm:$0xf]
        %v393 = vld [vmem:[%s371 + $0x54] sm:$0xf]
        %v394 = vld [vmem:[%s371 + $0x58] sm:$0xf]
        %v395 = vld [vmem:[%s371 + $0x5c] sm:$0xf]
        %v396 = vld [vmem:[%s371 + $0x60] sm:$0xf]
        %v397 = vld [vmem:[%s371 + $0x64] sm:$0xf]
        %v398 = vld [vmem:[%s371 + $0x68] sm:$0xf]
        %v399 = vld [vmem:[%s371 + $0x6c] sm:$0xf]
        %v400 = vld [vmem:[%s371 + $0x70] sm:$0xf]
        %v401 = vld [vmem:[%s371 + $0x74] sm:$0xf]
        %v402 = vld [vmem:[%s371 + $0x78] sm:$0xf]
        %v403 = vld [vmem:[%s371 + $0x7c] sm:$0xf]
        %v404 = vld [vmem:[%s325] sm:$0xff]
        %v405 = vld [vmem:[%s325 + $0x8] sm:$0xff]
        %v406 = vld [vmem:[%s325 + $0x10] sm:$0xff]
        %v407 = vld [vmem:[%s325 + $0x18] sm:$0xff]
        %v408 = vld [vmem:[%s325 + $0x20] sm:$0xff]
        %v409 = vld [vmem:[%s325 + $0x28] sm:$0xff]
        %v410 = vld [vmem:[%s325 + $0x30] sm:$0xff]
        %v411 = vld [vmem:[%s325 + $0x38] sm:$0xff]
        %v412 = vld [vmem:[%s325 + $0x40] sm:$0xff]
        %v413 = vld [vmem:[%s325 + $0x48] sm:$0xff]
        %v414 = vld [vmem:[%s325 + $0x50] sm:$0xff]
        %v415 = vld [vmem:[%s325 + $0x58] sm:$0xff]
        %v416 = vld [vmem:[%s325 + $0x60] sm:$0xff]
        %v417 = vld [vmem:[%s325 + $0x68] sm:$0xff]
        %v418 = vld [vmem:[%s325 + $0x70] sm:$0xff]
        %v419 = vld [vmem:[%s325 + $0x78] sm:$0xff]
        %v420 = vld [vmem:[%s325 + $0x80] sm:$0xff]
        %v421 = vld [vmem:[%s325 + $0x88] sm:$0xff]
        %v422 = vld [vmem:[%s325 + $0x90] sm:$0xff]
        %v423 = vld [vmem:[%s325 + $0x98] sm:$0xff]
        %v424 = vld [vmem:[%s325 + $0xa0] sm:$0xff]
        %v425 = vld [vmem:[%s325 + $0xa8] sm:$0xff]
        %v426 = vld [vmem:[%s325 + $0xb0] sm:$0xff]
        %v427 = vld [vmem:[%s325 + $0xb8] sm:$0xff]
        %v428 = vld [vmem:[%s325 + $0xc0] sm:$0xff]
        %v429 = vld [vmem:[%s325 + $0xc8] sm:$0xff]
        %v430 = vld [vmem:[%s325 + $0xd0] sm:$0xff]
        %v431 = vld [vmem:[%s325 + $0xd8] sm:$0xff]
        %v432 = vld [vmem:[%s325 + $0xe0] sm:$0xff]
        %v433 = vld [vmem:[%s325 + $0xe8] sm:$0xff]
        %v434 = vld [vmem:[%s325 + $0xf0] sm:$0xff]
        %v435 = vld [vmem:[%s325 + $0xf8] sm:$0xff]
        %v436 = vld [vmem:[%s277] sm:$0xff]
        %v437 = vld [vmem:[%s277 + $0x8] sm:$0xff]
        %v438 = vld [vmem:[%s277 + $0x10] sm:$0xff]
        %v439 = vld [vmem:[%s277 + $0x18] sm:$0xff]
        %v440 = vld [vmem:[%s277 + $0x20] sm:$0xff]
        %v441 = vld [vmem:[%s277 + $0x28] sm:$0xff]
        %v442 = vld [vmem:[%s277 + $0x30] sm:$0xff]
        %v443 = vld [vmem:[%s277 + $0x38] sm:$0xff]
        %v444 = vld [vmem:[%s277 + $0x40] sm:$0xff]
        %v445 = vld [vmem:[%s277 + $0x48] sm:$0xff]
        %v446 = vld [vmem:[%s277 + $0x50] sm:$0xff]
        %v447 = vld [vmem:[%s277 + $0x58] sm:$0xff]
        %v448 = vld [vmem:[%s277 + $0x60] sm:$0xff]
        %v449 = vld [vmem:[%s277 + $0x68] sm:$0xff]
        %v450 = vld [vmem:[%s277 + $0x70] sm:$0xff]
        %v451 = vld [vmem:[%s277 + $0x78] sm:$0xff]
        %v452 = vld [vmem:[%s277 + $0x80] sm:$0xff]
        %v453 = vld [vmem:[%s277 + $0x88] sm:$0xff]
        %v454 = vld [vmem:[%s277 + $0x90] sm:$0xff]
        %v455 = vld [vmem:[%s277 + $0x98] sm:$0xff]
        %v456 = vld [vmem:[%s277 + $0xa0] sm:$0xff]
        %v457 = vld [vmem:[%s277 + $0xa8] sm:$0xff]
        %v458 = vld [vmem:[%s277 + $0xb0] sm:$0xff]
        %v459 = vld [vmem:[%s277 + $0xb8] sm:$0xff]
        %v460 = vld [vmem:[%s277 + $0xc0] sm:$0xff]
        %v461 = vld [vmem:[%s277 + $0xc8] sm:$0xff]
        %v462 = vld [vmem:[%s277 + $0xd0] sm:$0xff]
        %v463 = vld [vmem:[%s277 + $0xd8] sm:$0xff]
        %v464 = vld [vmem:[%s277 + $0xe0] sm:$0xff]
        %v465 = vld [vmem:[%s277 + $0xe8] sm:$0xff]
        %v466 = vld [vmem:[%s277 + $0xf0] sm:$0xff]
        %v467 = vld [vmem:[%s277 + $0xf8] sm:$0xff]
        %v500 = vunpack.c.l.b16 %v436
        %v501 = vunpack.c.h.b16 %v436
        %v502 = vunpack.c.l.b16 %v437
        %v503 = vunpack.c.h.b16 %v437
        %v504 = vunpack.c.l.b16 %v438
        %v505 = vunpack.c.h.b16 %v438
        %v506 = vunpack.c.l.b16 %v439
        %v507 = vunpack.c.h.b16 %v439
        %v508 = vunpack.c.l.b16 %v440
        %v509 = vunpack.c.h.b16 %v440
        %v510 = vunpack.c.l.b16 %v441
        %v511 = vunpack.c.h.b16 %v441
        %v512 = vunpack.c.l.b16 %v442
        %v513 = vunpack.c.h.b16 %v442
        %v514 = vunpack.c.l.b16 %v443
        %v515 = vunpack.c.h.b16 %v443
        %v516 = vunpack.c.l.b16 %v444
        %v517 = vunpack.c.h.b16 %v444
        %v518 = vunpack.c.l.b16 %v445
        %v519 = vunpack.c.h.b16 %v445
        %v520 = vunpack.c.l.b16 %v446
        %v521 = vunpack.c.h.b16 %v446
        %v522 = vunpack.c.l.b16 %v447
        %v523 = vunpack.c.h.b16 %v447
        %v524 = vunpack.c.l.b16 %v448
        %v525 = vunpack.c.h.b16 %v448
        %v526 = vunpack.c.l.b16 %v449
        %v527 = vunpack.c.h.b16 %v449
        %v528 = vunpack.c.l.b16 %v450
        %v529 = vunpack.c.h.b16 %v450
        %v530 = vunpack.c.l.b16 %v451
        %v531 = vunpack.c.h.b16 %v451
        %v532 = vunpack.c.l.b16 %v452
        %v533 = vunpack.c.h.b16 %v452
        %v534 = vunpack.c.l.b16 %v453
        %v535 = vunpack.c.h.b16 %v453
        %v536 = vunpack.c.l.b16 %v454
        %v537 = vunpack.c.h.b16 %v454
        %v538 = vunpack.c.l.b16 %v455
        %v539 = vunpack.c.h.b16 %v455
        %v540 = vunpack.c.l.b16 %v456
        %v541 = vunpack.c.h.b16 %v456
        %v542 = vunpack.c.l.b16 %v457
        %v543 = vunpack.c.h.b16 %v457
        %v544 = vunpack.c.l.b16 %v458
        %v545 = vunpack.c.h.b16 %v458
        %v546 = vunpack.c.l.b16 %v459
        %v547 = vunpack.c.h.b16 %v459
        %v548 = vunpack.c.l.b16 %v460
        %v549 = vunpack.c.h.b16 %v460
        %v550 = vunpack.c.l.b16 %v461
        %v551 = vunpack.c.h.b16 %v461
        %v552 = vunpack.c.l.b16 %v462
        %v553 = vunpack.c.h.b16 %v462
        %v554 = vunpack.c.l.b16 %v463
        %v555 = vunpack.c.h.b16 %v463
        %v556 = vunpack.c.l.b16 %v464
        %v557 = vunpack.c.h.b16 %v464
        %v558 = vunpack.c.l.b16 %v465
        %v559 = vunpack.c.h.b16 %v465
        %v560 = vunpack.c.l.b16 %v466
        %v561 = vunpack.c.h.b16 %v466
        %v562 = vunpack.c.l.b16 %v467
        %v563 = vunpack.c.h.b16 %v467
        %v564 = vpack.c.b16 %v502, %v500
        %v565 = vpack.c.b16 %v503, %v501
        %v566 = vpack.c.b16 %v506, %v504
        %v567 = vpack.c.b16 %v507, %v505
        %v568 = vpack.c.b16 %v510, %v508
        %v569 = vpack.c.b16 %v511, %v509
        %v570 = vpack.c.b16 %v514, %v512
        %v571 = vpack.c.b16 %v515, %v513
        %v572 = vpack.c.b16 %v518, %v516
        %v573 = vpack.c.b16 %v519, %v517
        %v574 = vpack.c.b16 %v522, %v520
        %v575 = vpack.c.b16 %v523, %v521
        %v576 = vpack.c.b16 %v526, %v524
        %v577 = vpack.c.b16 %v527, %v525
        %v578 = vpack.c.b16 %v530, %v528
        %v579 = vpack.c.b16 %v531, %v529
        %v580 = vpack.c.b16 %v534, %v532
        %v581 = vpack.c.b16 %v535, %v533
        %v582 = vpack.c.b16 %v538, %v536
        %v583 = vpack.c.b16 %v539, %v537
        %v584 = vpack.c.b16 %v542, %v540
        %v585 = vpack.c.b16 %v543, %v541
        %v586 = vpack.c.b16 %v546, %v544
        %v587 = vpack.c.b16 %v547, %v545
        %v588 = vpack.c.b16 %v550, %v548
        %v589 = vpack.c.b16 %v551, %v549
        %v590 = vpack.c.b16 %v554, %v552
        %v591 = vpack.c.b16 %v555, %v553
        %v592 = vpack.c.b16 %v558, %v556
        %v593 = vpack.c.b16 %v559, %v557
        %v594 = vpack.c.b16 %v562, %v560
        %v595 = vpack.c.b16 %v563, %v561
        %v660 = vunpack.c.l.b16 %v372
        %v661 = vunpack.c.l.b16 %v373
        %v662 = vunpack.c.l.b16 %v374
        %v663 = vunpack.c.l.b16 %v375
        %v664 = vunpack.c.l.b16 %v376
        %v665 = vunpack.c.l.b16 %v377
        %v666 = vunpack.c.l.b16 %v378
        %v667 = vunpack.c.l.b16 %v379
        %v668 = vunpack.c.l.b16 %v380
        %v669 = vunpack.c.l.b16 %v381
        %v670 = vunpack.c.l.b16 %v382
        %v671 = vunpack.c.l.b16 %v383
        %v672 = vunpack.c.l.b16 %v384
        %v673 = vunpack.c.l.b16 %v385
        %v674 = vunpack.c.l.b16 %v386
        %v675 = vunpack.c.l.b16 %v387
        %v676 = vunpack.c.l.b16 %v388
        %v677 = vunpack.c.l.b16 %v389
        %v678 = vunpack.c.l.b16 %v390
        %v679 = vunpack.c.l.b16 %v391
        %v680 = vunpack.c.l.b16 %v392
        %v681 = vunpack.c.l.b16 %v393
        %v682 = vunpack.c.l.b16 %v394
        %v683 = vunpack.c.l.b16 %v395
        %v684 = vunpack.c.l.b16 %v396
        %v685 = vunpack.c.l.b16 %v397
        %v686 = vunpack.c.l.b16 %v398
        %v687 = vunpack.c.l.b16 %v399
        %v688 = vunpack.c.l.b16 %v400
        %v689 = vunpack.c.l.b16 %v401
        %v690 = vunpack.c.l.b16 %v402
        %v691 = vunpack.c.l.b16 %v403
        %v692 = vpack.c.b16 %v661, %v660
        %v693 = vpack.c.b16 %v663, %v662
        %v694 = vpack.c.b16 %v665, %v664
        %v695 = vpack.c.b16 %v667, %v666
        %v696 = vpack.c.b16 %v669, %v668
        %v697 = vpack.c.b16 %v671, %v670
        %v698 = vpack.c.b16 %v673, %v672
        %v699 = vpack.c.b16 %v675, %v674
        %v700 = vpack.c.b16 %v677, %v676
        %v701 = vpack.c.b16 %v679, %v678
        %v702 = vpack.c.b16 %v681, %v680
        %v703 = vpack.c.b16 %v683, %v682
        %v704 = vpack.c.b16 %v685, %v684
        %v705 = vpack.c.b16 %v687, %v686
        %v706 = vpack.c.b16 %v689, %v688
        %v707 = vpack.c.b16 %v691, %v690
        %724 = vmatprep.subr.bf16.mxu0 0
        %725 = vmatpush1.bf16.msra.mxu0 %v692
        %726 = vmatprep.subr.bf16.mxu0 0
        %727 = vmatpush1.bf16.msra.mxu0 %v693
        %728 = vmatprep.subr.bf16.mxu0 0
        %729 = vmatpush1.bf16.msra.mxu0 %v694
        %730 = vmatprep.subr.bf16.mxu0 0
        %731 = vmatpush1.bf16.msra.mxu0 %v695
        %732 = vmatprep.subr.bf16.mxu0 0
        %733 = vmatpush1.bf16.msra.mxu0 %v696
        %734 = vmatprep.subr.bf16.mxu0 0
        %735 = vmatpush1.bf16.msra.mxu0 %v697
        %736 = vmatprep.subr.bf16.mxu0 0
        %737 = vmatpush1.bf16.msra.mxu0 %v698
        %738 = vmatprep.subr.bf16.mxu0 0
        %739 = vmatpush1.bf16.msra.mxu0 %v699
        %740 = vmatprep.subr.bf16.mxu0 0
        %741 = vmatpush1.bf16.msra.mxu0 %v700
        %742 = vmatprep.subr.bf16.mxu0 0
        %743 = vmatpush1.bf16.msra.mxu0 %v701
        %744 = vmatprep.subr.bf16.mxu0 0
        %745 = vmatpush1.bf16.msra.mxu0 %v702
        %746 = vmatprep.subr.bf16.mxu0 0
        %747 = vmatpush1.bf16.msra.mxu0 %v703
        %748 = vmatprep.subr.bf16.mxu0 0
        %749 = vmatpush1.bf16.msra.mxu0 %v704
        %750 = vmatprep.subr.bf16.mxu0 0
        %751 = vmatpush1.bf16.msra.mxu0 %v705
        %752 = vmatprep.subr.bf16.mxu0 0
        %753 = vmatpush1.bf16.msra.mxu0 %v706
        %754 = vmatprep.subr.bf16.mxu0 0
        %755 = vmatpush1.bf16.msra.mxu0 %v707
        %756 = vmatprep.mubr.bf16.mxu0 %v565
        %757 = vmatmul.mubr.bf16.gmra.mrb[0].mxu0 %v564
        %v758 = vpop.f32.mrb[0].mxu0
        %v759 = vadd.f32 0.0, %v758
        %v760 = vpop.f32.mrb[0].mxu0
        %v761 = vpop.f32.mrb[0].mxu0
        %v762 = vadd.f32 0.0, %v761
        %v763 = vpop.f32.mrb[0].mxu0
        %764 = vmatprep.mubr.bf16.mxu0 %v567
        %765 = vmatmul.mubr.bf16.gmra.mrb[0].mxu0 %v566
        %v766 = vpop.f32.mrb[0].mxu0
        %v767 = vadd.f32 0.0, %v766
        %v768 = vpop.f32.mrb[0].mxu0
        %v769 = vpop.f32.mrb[0].mxu0
        %v770 = vadd.f32 0.0, %v769
        %v771 = vpop.f32.mrb[0].mxu0
        %772 = vmatprep.mubr.bf16.mxu0 %v569
        %773 = vmatmul.mubr.bf16.gmra.mrb[0].mxu0 %v568
        %v774 = vpop.f32.mrb[0].mxu0
        %v775 = vadd.f32 0.0, %v774
        %v776 = vpop.f32.mrb[0].mxu0
        %v777 = vpop.f32.mrb[0].mxu0
        %v778 = vadd.f32 0.0, %v777
        %v779 = vpop.f32.mrb[0].mxu0
        %780 = vmatprep.mubr.bf16.mxu0 %v571
        %781 = vmatmul.mubr.bf16.gmra.mrb[0].mxu0 %v570
        %v782 = vpop.f32.mrb[0].mxu0
        %v783 = vadd.f32 0.0, %v782
        %v784 = vpop.f32.mrb[0].mxu0
        %v785 = vpop.f32.mrb[0].mxu0
        %v786 = vadd.f32 0.0, %v785
        %v787 = vpop.f32.mrb[0].mxu0
        %788 = vmatprep.mubr.bf16.mxu0 %v573
        %789 = vmatmul.mubr.bf16.gmra.mrb[0].mxu0 %v572
        %v790 = vpop.f32.mrb[0].mxu0
        %v791 = vadd.f32 0.0, %v790
        %v792 = vpop.f32.mrb[0].mxu0
        %v793 = vpop.f32.mrb[0].mxu0
        %v794 = vadd.f32 0.0, %v793
        %v795 = vpop.f32.mrb[0].mxu0
        %796 = vmatprep.mubr.bf16.mxu0 %v575
        %797 = vmatmul.mubr.bf16.gmra.mrb[0].mxu0 %v574
        %v798 = vpop.f32.mrb[0].mxu0
        %v799 = vadd.f32 0.0, %v798
        %v800 = vpop.f32.mrb[0].mxu0
        %v801 = vpop.f32.mrb[0].mxu0
        %v802 = vadd.f32 0.0, %v801
        %v803 = vpop.f32.mrb[0].mxu0
        %804 = vmatprep.mubr.bf16.mxu0 %v577
        %805 = vmatmul.mubr.bf16.gmra.mrb[0].mxu0 %v576
        %v806 = vpop.f32.mrb[0].mxu0
        %v807 = vadd.f32 0.0, %v806
        %v808 = vpop.f32.mrb[0].mxu0
        %v809 = vpop.f32.mrb[0].mxu0
        %v810 = vadd.f32 0.0, %v809
        %v811 = vpop.f32.mrb[0].mxu0
        %812 = vmatprep.mubr.bf16.mxu0 %v579
        %813 = vmatmul.mubr.bf16.gmra.mrb[0].mxu0 %v578
        %v814 = vpop.f32.mrb[0].mxu0
        %v815 = vadd.f32 0.0, %v814
        %v816 = vpop.f32.mrb[0].mxu0
        %v817 = vpop.f32.mrb[0].mxu0
        %v818 = vadd.f32 0.0, %v817
        %v819 = vpop.f32.mrb[0].mxu0
        %820 = vmatprep.mubr.bf16.mxu0 %v581
        %821 = vmatmul.mubr.bf16.gmra.mrb[0].mxu0 %v580
        %v822 = vpop.f32.mrb[0].mxu0
        %v823 = vadd.f32 0.0, %v822
        %v824 = vpop.f32.mrb[0].mxu0
        %v825 = vpop.f32.mrb[0].mxu0
        %v826 = vadd.f32 0.0, %v825
        %v827 = vpop.f32.mrb[0].mxu0
        %828 = vmatprep.mubr.bf16.mxu0 %v583
        %829 = vmatmul.mubr.bf16.gmra.mrb[0].mxu0 %v582
        %v830 = vpop.f32.mrb[0].mxu0
        %v831 = vadd.f32 0.0, %v830
        %v832 = vpop.f32.mrb[0].mxu0
        %v833 = vpop.f32.mrb[0].mxu0
        %v834 = vadd.f32 0.0, %v833
        %v835 = vpop.f32.mrb[0].mxu0
        %836 = vmatprep.mubr.bf16.mxu0 %v585
        %837 = vmatmul.mubr.bf16.gmra.mrb[0].mxu0 %v584
        %v838 = vpop.f32.mrb[0].mxu0
        %v839 = vadd.f32 0.0, %v838
        %v840 = vpop.f32.mrb[0].mxu0
        %v841 = vpop.f32.mrb[0].mxu0
        %v842 = vadd.f32 0.0, %v841
        %v843 = vpop.f32.mrb[0].mxu0
        %844 = vmatprep.mubr.bf16.mxu0 %v587
        %845 = vmatmul.mubr.bf16.gmra.mrb[0].mxu0 %v586
        %v846 = vpop.f32.mrb[0].mxu0
        %v847 = vadd.f32 0.0, %v846
        %v848 = vpop.f32.mrb[0].mxu0
        %v849 = vpop.f32.mrb[0].mxu0
        %v850 = vadd.f32 0.0, %v849
        %v851 = vpop.f32.mrb[0].mxu0
        %852 = vmatprep.mubr.bf16.mxu0 %v589
        %853 = vmatmul.mubr.bf16.gmra.mrb[0].mxu0 %v588
        %v854 = vpop.f32.mrb[0].mxu0
        %v855 = vadd.f32 0.0, %v854
        %v856 = vpop.f32.mrb[0].mxu0
        %v857 = vpop.f32.mrb[0].mxu0
        %v858 = vadd.f32 0.0, %v857
        %v859 = vpop.f32.mrb[0].mxu0
        %860 = vmatprep.mubr.bf16.mxu0 %v591
        %861 = vmatmul.mubr.bf16.gmra.mrb[0].mxu0 %v590
        %v862 = vpop.f32.mrb[0].mxu0
        %v863 = vadd.f32 0.0, %v862
        %v864 = vpop.f32.mrb[0].mxu0
        %v865 = vpop.f32.mrb[0].mxu0
        %v866 = vadd.f32 0.0, %v865
        %v867 = vpop.f32.mrb[0].mxu0
        %868 = vmatprep.mubr.bf16.mxu0 %v593
        %869 = vmatmul.mubr.bf16.gmra.mrb[0].mxu0 %v592
        %v870 = vpop.f32.mrb[0].mxu0
        %v871 = vadd.f32 0.0, %v870
        %v872 = vpop.f32.mrb[0].mxu0
        %v873 = vpop.f32.mrb[0].mxu0
        %v874 = vadd.f32 0.0, %v873
        %v875 = vpop.f32.mrb[0].mxu0
        %876 = vmatprep.mubr.bf16.mxu0 %v595
        %877 = vmatmul.mubr.bf16.gmra.mrb[0].mxu0 %v594
        %v878 = vpop.f32.mrb[0].mxu0
        %v879 = vadd.f32 0.0, %v878
        %v880 = vpop.f32.mrb[0].mxu0
        %v881 = vpop.f32.mrb[0].mxu0
        %v882 = vadd.f32 0.0, %v881
        %v883 = vpop.f32.mrb[0].mxu0
        %884 = vdwg.mxu0
        %v885 = vadd.f32 %v404, %v759
        %v886 = vadd.f32 %v405, %v762
        %v887 = vadd.f32 %v406, %v767
        %v888 = vadd.f32 %v407, %v770
        %v889 = vadd.f32 %v408, %v775
        %v890 = vadd.f32 %v409, %v778
        %v891 = vadd.f32 %v410, %v783
        %v892 = vadd.f32 %v411, %v786
        %v893 = vadd.f32 %v412, %v791
        %v894 = vadd.f32 %v413, %v794
        %v895 = vadd.f32 %v414, %v799
        %v896 = vadd.f32 %v415, %v802
        %v897 = vadd.f32 %v416, %v807
        %v898 = vadd.f32 %v417, %v810
        %v899 = vadd.f32 %v418, %v815
        %v900 = vadd.f32 %v419, %v818
        %v901 = vadd.f32 %v420, %v823
        %v902 = vadd.f32 %v421, %v826
        %v903 = vadd.f32 %v422, %v831
        %v904 = vadd.f32 %v423, %v834
        %v905 = vadd.f32 %v424, %v839
        %v906 = vadd.f32 %v425, %v842
        %v907 = vadd.f32 %v426, %v847
        %v908 = vadd.f32 %v427, %v850
        %v909 = vadd.f32 %v428, %v855
        %v910 = vadd.f32 %v429, %v858
        %v911 = vadd.f32 %v430, %v863
        %v912 = vadd.f32 %v431, %v866
        %v913 = vadd.f32 %v432, %v871
        %v914 = vadd.f32 %v433, %v874
        %v915 = vadd.f32 %v434, %v879
        %v916 = vadd.f32 %v435, %v882
        %917 = vst [vmem:[%s325] sm:$0xff] %v885
        %918 = vst [vmem:[%s325 + $0x8] sm:$0xff] %v886
        %919 = vst [vmem:[%s325 + $0x10] sm:$0xff] %v887
        %920 = vst [vmem:[%s325 + $0x18] sm:$0xff] %v888
        %921 = vst [vmem:[%s325 + $0x20] sm:$0xff] %v889
        %922 = vst [vmem:[%s325 + $0x28] sm:$0xff] %v890
        %923 = vst [vmem:[%s325 + $0x30] sm:$0xff] %v891
        %924 = vst [vmem:[%s325 + $0x38] sm:$0xff] %v892
        %925 = vst [vmem:[%s325 + $0x40] sm:$0xff] %v893
        %926 = vst [vmem:[%s325 + $0x48] sm:$0xff] %v894
        %927 = vst [vmem:[%s325 + $0x50] sm:$0xff] %v895
        %928 = vst [vmem:[%s325 + $0x58] sm:$0xff] %v896
        %929 = vst [vmem:[%s325 + $0x60] sm:$0xff] %v897
        %930 = vst [vmem:[%s325 + $0x68] sm:$0xff] %v898
        %931 = vst [vmem:[%s325 + $0x70] sm:$0xff] %v899
        %932 = vst [vmem:[%s325 + $0x78] sm:$0xff] %v900
        %933 = vst [vmem:[%s325 + $0x80] sm:$0xff] %v901
        %934 = vst [vmem:[%s325 + $0x88] sm:$0xff] %v902
        %935 = vst [vmem:[%s325 + $0x90] sm:$0xff] %v903
        %936 = vst [vmem:[%s325 + $0x98] sm:$0xff] %v904
        %937 = vst [vmem:[%s325 + $0xa0] sm:$0xff] %v905
        %938 = vst [vmem:[%s325 + $0xa8] sm:$0xff] %v906
        %939 = vst [vmem:[%s325 + $0xb0] sm:$0xff] %v907
        %940 = vst [vmem:[%s325 + $0xb8] sm:$0xff] %v908
        %941 = vst [vmem:[%s325 + $0xc0] sm:$0xff] %v909
        %942 = vst [vmem:[%s325 + $0xc8] sm:$0xff] %v910
        %943 = vst [vmem:[%s325 + $0xd0] sm:$0xff] %v911
        %944 = vst [vmem:[%s325 + $0xd8] sm:$0xff] %v912
        %945 = vst [vmem:[%s325 + $0xe0] sm:$0xff] %v913
        %946 = vst [vmem:[%s325 + $0xe8] sm:$0xff] %v914
        %947 = vst [vmem:[%s325 + $0xf0] sm:$0xff] %v915
        %948 = vst [vmem:[%s325 + $0xf8] sm:$0xff] %v916
        %p949 = scmp.eq.s32.totalorder %s28, 1
        // Predicated region
        $region61: #{tpu_custom_call.1} parent=39 // pred_check
          %p950 = pneg %p949
        $region62: #{tpu_custom_call.1} parent=39 // pred_check_branch
          %952 = sbr.rel (%p950) target = $region64
        $region63: #{tpu_custom_call.1} parent=39 // pred_region
          %v953 = vld [vmem:[%s325] sm:$0xff]
          %v954 = vld [vmem:[%s325 + $0x8] sm:$0xff]
          %v955 = vld [vmem:[%s325 + $0x10] sm:$0xff]
          %v956 = vld [vmem:[%s325 + $0x18] sm:$0xff]
          %v957 = vld [vmem:[%s325 + $0x20] sm:$0xff]
          %v958 = vld [vmem:[%s325 + $0x28] sm:$0xff]
          %v959 = vld [vmem:[%s325 + $0x30] sm:$0xff]
          %v960 = vld [vmem:[%s325 + $0x38] sm:$0xff]
          %v961 = vld [vmem:[%s325 + $0x40] sm:$0xff]
          %v962 = vld [vmem:[%s325 + $0x48] sm:$0xff]
          %v963 = vld [vmem:[%s325 + $0x50] sm:$0xff]
          %v964 = vld [vmem:[%s325 + $0x58] sm:$0xff]
          %v965 = vld [vmem:[%s325 + $0x60] sm:$0xff]
          %v966 = vld [vmem:[%s325 + $0x68] sm:$0xff]
          %v967 = vld [vmem:[%s325 + $0x70] sm:$0xff]
          %v968 = vld [vmem:[%s325 + $0x78] sm:$0xff]
          %v969 = vld [vmem:[%s325 + $0x80] sm:$0xff]
          %v970 = vld [vmem:[%s325 + $0x88] sm:$0xff]
          %v971 = vld [vmem:[%s325 + $0x90] sm:$0xff]
          %v972 = vld [vmem:[%s325 + $0x98] sm:$0xff]
          %v973 = vld [vmem:[%s325 + $0xa0] sm:$0xff]
          %v974 = vld [vmem:[%s325 + $0xa8] sm:$0xff]
          %v975 = vld [vmem:[%s325 + $0xb0] sm:$0xff]
          %v976 = vld [vmem:[%s325 + $0xb8] sm:$0xff]
          %v977 = vld [vmem:[%s325 + $0xc0] sm:$0xff]
          %v978 = vld [vmem:[%s325 + $0xc8] sm:$0xff]
          %v979 = vld [vmem:[%s325 + $0xd0] sm:$0xff]
          %v980 = vld [vmem:[%s325 + $0xd8] sm:$0xff]
          %v981 = vld [vmem:[%s325 + $0xe0] sm:$0xff]
          %v982 = vld [vmem:[%s325 + $0xe8] sm:$0xff]
          %v983 = vld [vmem:[%s325 + $0xf0] sm:$0xff]
          %v984 = vld [vmem:[%s325 + $0xf8] sm:$0xff]
          %v985 = vpack.c.bf16 %v954, %v953
          %v986 = vpack.c.bf16 %v956, %v955
          %v987 = vpack.c.bf16 %v958, %v957
          %v988 = vpack.c.bf16 %v960, %v959
          %v989 = vpack.c.bf16 %v962, %v961
          %v990 = vpack.c.bf16 %v964, %v963
          %v991 = vpack.c.bf16 %v966, %v965
          %v992 = vpack.c.bf16 %v968, %v967
          %v993 = vpack.c.bf16 %v970, %v969
          %v994 = vpack.c.bf16 %v972, %v971
          %v995 = vpack.c.bf16 %v974, %v973
          %v996 = vpack.c.bf16 %v976, %v975
          %v997 = vpack.c.bf16 %v978, %v977
          %v998 = vpack.c.bf16 %v980, %v979
          %v999 = vpack.c.bf16 %v982, %v981
          %v1000 = vpack.c.bf16 %v984, %v983
          %v1001 = vld [vmem:[#allocation8] sm:$0xf]
          %v1002 = vld [vmem:[#allocation8 + $0x4] sm:$0xf]
          %v1003 = vld [vmem:[#allocation8 + $0x8] sm:$0xf]
          %v1004 = vld [vmem:[#allocation8 + $0xc] sm:$0xf]
          %v1005 = vld [vmem:[#allocation8 + $0x10] sm:$0xf]
          %v1006 = vld [vmem:[#allocation8 + $0x14] sm:$0xf]
          %v1007 = vld [vmem:[#allocation8 + $0x18] sm:$0xf]
          %v1008 = vld [vmem:[#allocation8 + $0x1c] sm:$0xf]
          %v1009 = vld [vmem:[#allocation8 + $0x20] sm:$0xf]
          %v1010 = vld [vmem:[#allocation8 + $0x24] sm:$0xf]
          %v1011 = vld [vmem:[#allocation8 + $0x28] sm:$0xf]
          %v1012 = vld [vmem:[#allocation8 + $0x2c] sm:$0xf]
          %v1013 = vld [vmem:[#allocation8 + $0x30] sm:$0xf]
          %v1014 = vld [vmem:[#allocation8 + $0x34] sm:$0xf]
          %v1015 = vld [vmem:[#allocation8 + $0x38] sm:$0xf]
          %v1016 = vld [vmem:[#allocation8 + $0x3c] sm:$0xf]
          %v1017 = vld [vmem:[%s4] sm:$0x1]
          %v1019 = vlaneseq
          %v1020 = vshrl.u32 %v1019, 7
          %v1021 = vsub.s32 0, %v1020
          %v1022 = vrot.slane %v1017, %v1021
          %v1040 = vunpack.c.l.b16 %v1001
          %v1041 = vunpack.c.l.b16 %v1002
          %v1042 = vunpack.c.l.b16 %v1003
          %v1043 = vunpack.c.l.b16 %v1004
          %v1044 = vunpack.c.l.b16 %v1005
          %v1045 = vunpack.c.l.b16 %v1006
          %v1046 = vunpack.c.l.b16 %v1007
          %v1047 = vunpack.c.l.b16 %v1008
          %v1048 = vunpack.c.l.b16 %v1009
          %v1049 = vunpack.c.l.b16 %v1010
          %v1050 = vunpack.c.l.b16 %v1011
          %v1051 = vunpack.c.l.b16 %v1012
          %v1052 = vunpack.c.l.b16 %v1013
          %v1053 = vunpack.c.l.b16 %v1014
          %v1054 = vunpack.c.l.b16 %v1015
          %v1055 = vunpack.c.l.b16 %v1016
          %v1056 = vpack.c.b16 %v1041, %v1040
          %v1057 = vpack.c.b16 %v1043, %v1042
          %v1058 = vpack.c.b16 %v1045, %v1044
          %v1059 = vpack.c.b16 %v1047, %v1046
          %v1060 = vpack.c.b16 %v1049, %v1048
          %v1061 = vpack.c.b16 %v1051, %v1050
          %v1062 = vpack.c.b16 %v1053, %v1052
          %v1063 = vpack.c.b16 %v1055, %v1054
          %1072 = vmatprep.subr.bf16.mxu0 0
          %1073 = vmatpush1.bf16.msra.mxu0 %v1056
          %1074 = vmatprep.subr.bf16.mxu0 0
          %1075 = vmatpush1.bf16.msra.mxu0 %v1057
          %1076 = vmatprep.subr.bf16.mxu0 0
          %1077 = vmatpush1.bf16.msra.mxu0 %v1058
          %1078 = vmatprep.subr.bf16.mxu0 0
          %1079 = vmatpush1.bf16.msra.mxu0 %v1059
          %1080 = vmatprep.subr.bf16.mxu0 0
          %1081 = vmatpush1.bf16.msra.mxu0 %v1060
          %1082 = vmatprep.subr.bf16.mxu0 0
          %1083 = vmatpush1.bf16.msra.mxu0 %v1061
          %1084 = vmatprep.subr.bf16.mxu0 0
          %1085 = vmatpush1.bf16.msra.mxu0 %v1062
          %1086 = vmatprep.subr.bf16.mxu0 0
          %1087 = vmatpush1.bf16.msra.mxu0 %v1063
          %1088 = vmatprep.subr.bf16.mxu0 0
          %1089 = vmatpush1.bf16.msra.mxu0 0
          %1090 = vmatprep.subr.bf16.mxu0 0
          %1091 = vmatpush1.bf16.msra.mxu0 0
          %1092 = vmatprep.subr.bf16.mxu0 0
          %1093 = vmatpush1.bf16.msra.mxu0 0
          %1094 = vmatprep.subr.bf16.mxu0 0
          %1095 = vmatpush1.bf16.msra.mxu0 0
          %1096 = vmatprep.subr.bf16.mxu0 0
          %1097 = vmatpush1.bf16.msra.mxu0 0
          %1098 = vmatprep.subr.bf16.mxu0 0
          %1099 = vmatpush1.bf16.msra.mxu0 0
          %1100 = vmatprep.subr.bf16.mxu0 0
          %1101 = vmatpush1.bf16.msra.mxu0 0
          %1102 = vmatprep.subr.bf16.mxu0 0
          %1103 = vmatpush1.bf16.msra.mxu0 0
          %1104 = vmatprep.mubr.bf16.mxu0 0
          %1105 = vmatmul.mubr.bf16.gmra.mrb[0].mxu0 %v985
          %v1106 = vpop.f32.mrb[0].mxu0
          %v1107 = vadd.f32 %v1022, %v1106
          %v1108 = vpop.f32.mrb[0].mxu0
          %v1109 = vpop.f32.mrb[0].mxu0
          %v1110 = vadd.f32 %v1022, %v1109
          %v1111 = vpop.f32.mrb[0].mxu0
          %1112 = vmatprep.mubr.bf16.mxu0 0
          %1113 = vmatmul.mubr.bf16.gmra.mrb[0].mxu0 %v986
          %v1114 = vpop.f32.mrb[0].mxu0
          %v1115 = vadd.f32 %v1022, %v1114
          %v1116 = vpop.f32.mrb[0].mxu0
          %v1117 = vpop.f32.mrb[0].mxu0
          %v1118 = vadd.f32 %v1022, %v1117
          %v1119 = vpop.f32.mrb[0].mxu0
          %1120 = vmatprep.mubr.bf16.mxu0 0
          %1121 = vmatmul.mubr.bf16.gmra.mrb[0].mxu0 %v987
          %v1122 = vpop.f32.mrb[0].mxu0
          %v1123 = vadd.f32 %v1022, %v1122
          %v1124 = vpop.f32.mrb[0].mxu0
          %v1125 = vpop.f32.mrb[0].mxu0
          %v1126 = vadd.f32 %v1022, %v1125
          %v1127 = vpop.f32.mrb[0].mxu0
          %1128 = vmatprep.mubr.bf16.mxu0 0
          %1129 = vmatmul.mubr.bf16.gmra.mrb[0].mxu0 %v988
          %v1130 = vpop.f32.mrb[0].mxu0
          %v1131 = vadd.f32 %v1022, %v1130
          %v1132 = vpop.f32.mrb[0].mxu0
          %v1133 = vpop.f32.mrb[0].mxu0
          %v1134 = vadd.f32 %v1022, %v1133
          %v1135 = vpop.f32.mrb[0].mxu0
          %1136 = vmatprep.mubr.bf16.mxu0 0
          %1137 = vmatmul.mubr.bf16.gmra.mrb[0].mxu0 %v989
          %v1138 = vpop.f32.mrb[0].mxu0
          %v1139 = vadd.f32 %v1022, %v1138
          %v1140 = vpop.f32.mrb[0].mxu0
          %v1141 = vpop.f32.mrb[0].mxu0
          %v1142 = vadd.f32 %v1022, %v1141
          %v1143 = vpop.f32.mrb[0].mxu0
          %1144 = vmatprep.mubr.bf16.mxu0 0
          %1145 = vmatmul.mubr.bf16.gmra.mrb[0].mxu0 %v990
          %v1146 = vpop.f32.mrb[0].mxu0
          %v1147 = vadd.f32 %v1022, %v1146
          %v1148 = vpop.f32.mrb[0].mxu0
          %v1149 = vpop.f32.mrb[0].mxu0
          %v1150 = vadd.f32 %v1022, %v1149
          %v1151 = vpop.f32.mrb[0].mxu0
          %1152 = vmatprep.mubr.bf16.mxu0 0
          %1153 = vmatmul.mubr.bf16.gmra.mrb[0].mxu0 %v991
          %v1154 = vpop.f32.mrb[0].mxu0
          %v1155 = vadd.f32 %v1022, %v1154
          %v1156 = vpop.f32.mrb[0].mxu0
          %v1157 = vpop.f32.mrb[0].mxu0
          %v1158 = vadd.f32 %v1022, %v1157
          %v1159 = vpop.f32.mrb[0].mxu0
          %1160 = vmatprep.mubr.bf16.mxu0 0
          %1161 = vmatmul.mubr.bf16.gmra.mrb[0].mxu0 %v992
          %v1162 = vpop.f32.mrb[0].mxu0
          %v1163 = vadd.f32 %v1022, %v1162
          %v1164 = vpop.f32.mrb[0].mxu0
          %v1165 = vpop.f32.mrb[0].mxu0
          %v1166 = vadd.f32 %v1022, %v1165
          %v1167 = vpop.f32.mrb[0].mxu0
          %1168 = vmatprep.mubr.bf16.mxu0 0
          %1169 = vmatmul.mubr.bf16.gmra.mrb[0].mxu0 %v993
          %v1170 = vpop.f32.mrb[0].mxu0
          %v1171 = vadd.f32 %v1022, %v1170
          %v1172 = vpop.f32.mrb[0].mxu0
          %v1173 = vpop.f32.mrb[0].mxu0
          %v1174 = vadd.f32 %v1022, %v1173
          %v1175 = vpop.f32.mrb[0].mxu0
          %1176 = vmatprep.mubr.bf16.mxu0 0
          %1177 = vmatmul.mubr.bf16.gmra.mrb[0].mxu0 %v994
          %v1178 = vpop.f32.mrb[0].mxu0
          %v1179 = vadd.f32 %v1022, %v1178
          %v1180 = vpop.f32.mrb[0].mxu0
          %v1181 = vpop.f32.mrb[0].mxu0
          %v1182 = vadd.f32 %v1022, %v1181
          %v1183 = vpop.f32.mrb[0].mxu0
          %1184 = vmatprep.mubr.bf16.mxu0 0
          %1185 = vmatmul.mubr.bf16.gmra.mrb[0].mxu0 %v995
          %v1186 = vpop.f32.mrb[0].mxu0
          %v1187 = vadd.f32 %v1022, %v1186
          %v1188 = vpop.f32.mrb[0].mxu0
          %v1189 = vpop.f32.mrb[0].mxu0
          %v1190 = vadd.f32 %v1022, %v1189
          %v1191 = vpop.f32.mrb[0].mxu0
          %1192 = vmatprep.mubr.bf16.mxu0 0
          %1193 = vmatmul.mubr.bf16.gmra.mrb[0].mxu0 %v996
          %v1194 = vpop.f32.mrb[0].mxu0
          %v1195 = vadd.f32 %v1022, %v1194
          %v1196 = vpop.f32.mrb[0].mxu0
          %v1197 = vpop.f32.mrb[0].mxu0
          %v1198 = vadd.f32 %v1022, %v1197
          %v1199 = vpop.f32.mrb[0].mxu0
          %1200 = vmatprep.mubr.bf16.mxu0 0
          %1201 = vmatmul.mubr.bf16.gmra.mrb[0].mxu0 %v997
          %v1202 = vpop.f32.mrb[0].mxu0
          %v1203 = vadd.f32 %v1022, %v1202
          %v1204 = vpop.f32.mrb[0].mxu0
          %v1205 = vpop.f32.mrb[0].mxu0
          %v1206 = vadd.f32 %v1022, %v1205
          %v1207 = vpop.f32.mrb[0].mxu0
          %1208 = vmatprep.mubr.bf16.mxu0 0
          %1209 = vmatmul.mubr.bf16.gmra.mrb[0].mxu0 %v998
          %v1210 = vpop.f32.mrb[0].mxu0
          %v1211 = vadd.f32 %v1022, %v1210
          %v1212 = vpop.f32.mrb[0].mxu0
          %v1213 = vpop.f32.mrb[0].mxu0
          %v1214 = vadd.f32 %v1022, %v1213
          %v1215 = vpop.f32.mrb[0].mxu0
          %1216 = vmatprep.mubr.bf16.mxu0 0
          %1217 = vmatmul.mubr.bf16.gmra.mrb[0].mxu0 %v999
          %v1218 = vpop.f32.mrb[0].mxu0
          %v1219 = vadd.f32 %v1022, %v1218
          %v1220 = vpop.f32.mrb[0].mxu0
          %v1221 = vpop.f32.mrb[0].mxu0
          %v1222 = vadd.f32 %v1022, %v1221
          %v1223 = vpop.f32.mrb[0].mxu0
          %1224 = vmatprep.mubr.bf16.mxu0 0
          %1225 = vmatmul.mubr.bf16.gmra.mrb[0].mxu0 %v1000
          %v1226 = vpop.f32.mrb[0].mxu0
          %v1227 = vadd.f32 %v1022, %v1226
          %v1228 = vpop.f32.mrb[0].mxu0
          %v1229 = vpop.f32.mrb[0].mxu0
          %v1230 = vadd.f32 %v1022, %v1229
          %v1231 = vpop.f32.mrb[0].mxu0
          %1232 = vdwg.mxu0
          %v1233 = vmax.f32 %v1107, 0.0
          %v1234 = vmax.f32 %v1110, 0.0
          %v1235 = vmax.f32 %v1115, 0.0
          %v1236 = vmax.f32 %v1118, 0.0
          %v1237 = vmax.f32 %v1123, 0.0
          %v1238 = vmax.f32 %v1126, 0.0
          %v1239 = vmax.f32 %v1131, 0.0
          %v1240 = vmax.f32 %v1134, 0.0
          %v1241 = vmax.f32 %v1139, 0.0
          %v1242 = vmax.f32 %v1142, 0.0
          %v1243 = vmax.f32 %v1147, 0.0
          %v1244 = vmax.f32 %v1150, 0.0
          %v1245 = vmax.f32 %v1155, 0.0
          %v1246 = vmax.f32 %v1158, 0.0
          %v1247 = vmax.f32 %v1163, 0.0
          %v1248 = vmax.f32 %v1166, 0.0
          %v1249 = vmax.f32 %v1171, 0.0
          %v1250 = vmax.f32 %v1174, 0.0
          %v1251 = vmax.f32 %v1179, 0.0
          %v1252 = vmax.f32 %v1182, 0.0
          %v1253 = vmax.f32 %v1187, 0.0
          %v1254 = vmax.f32 %v1190, 0.0
          %v1255 = vmax.f32 %v1195, 0.0
          %v1256 = vmax.f32 %v1198, 0.0
          %v1257 = vmax.f32 %v1203, 0.0
          %v1258 = vmax.f32 %v1206, 0.0
          %v1259 = vmax.f32 %v1211, 0.0
          %v1260 = vmax.f32 %v1214, 0.0
          %v1261 = vmax.f32 %v1219, 0.0
          %v1262 = vmax.f32 %v1222, 0.0
          %v1263 = vmax.f32 %v1227, 0.0
          %v1264 = vmax.f32 %v1230, 0.0
          %v1265 = vld [vmem:[%s290] sm:$0xff]
          %v1266 = vld [vmem:[%s290 + $0x8] sm:$0xff]
          %v1267 = vld [vmem:[%s290 + $0x10] sm:$0xff]
          %v1268 = vld [vmem:[%s290 + $0x18] sm:$0xff]
          %v1269 = vld [vmem:[%s290 + $0x20] sm:$0xff]
          %v1270 = vld [vmem:[%s290 + $0x28] sm:$0xff]
          %v1271 = vld [vmem:[%s290 + $0x30] sm:$0xff]
          %v1272 = vld [vmem:[%s290 + $0x38] sm:$0xff]
          %v1273 = vld [vmem:[%s290 + $0x40] sm:$0xff]
          %v1274 = vld [vmem:[%s290 + $0x48] sm:$0xff]
          %v1275 = vld [vmem:[%s290 + $0x50] sm:$0xff]
          %v1276 = vld [vmem:[%s290 + $0x58] sm:$0xff]
          %v1277 = vld [vmem:[%s290 + $0x60] sm:$0xff]
          %v1278 = vld [vmem:[%s290 + $0x68] sm:$0xff]
          %v1279 = vld [vmem:[%s290 + $0x70] sm:$0xff]
          %v1280 = vld [vmem:[%s290 + $0x78] sm:$0xff]
          %v1281 = vld [vmem:[%s290 + $0x80] sm:$0xff]
          %v1282 = vld [vmem:[%s290 + $0x88] sm:$0xff]
          %v1283 = vld [vmem:[%s290 + $0x90] sm:$0xff]
          %v1284 = vld [vmem:[%s290 + $0x98] sm:$0xff]
          %v1285 = vld [vmem:[%s290 + $0xa0] sm:$0xff]
          %v1286 = vld [vmem:[%s290 + $0xa8] sm:$0xff]
          %v1287 = vld [vmem:[%s290 + $0xb0] sm:$0xff]
          %v1288 = vld [vmem:[%s290 + $0xb8] sm:$0xff]
          %v1289 = vld [vmem:[%s290 + $0xc0] sm:$0xff]
          %v1290 = vld [vmem:[%s290 + $0xc8] sm:$0xff]
          %v1291 = vld [vmem:[%s290 + $0xd0] sm:$0xff]
          %v1292 = vld [vmem:[%s290 + $0xd8] sm:$0xff]
          %v1293 = vld [vmem:[%s290 + $0xe0] sm:$0xff]
          %v1294 = vld [vmem:[%s290 + $0xe8] sm:$0xff]
          %v1295 = vld [vmem:[%s290 + $0xf0] sm:$0xff]
          %v1296 = vld [vmem:[%s290 + $0xf8] sm:$0xff]
          %v1297 = vadd.f32 %v1233, %v1265
          %v1298 = vadd.f32 %v1234, %v1266
          %v1299 = vadd.f32 %v1235, %v1267
          %v1300 = vadd.f32 %v1236, %v1268
          %v1301 = vadd.f32 %v1237, %v1269
          %v1302 = vadd.f32 %v1238, %v1270
          %v1303 = vadd.f32 %v1239, %v1271
          %v1304 = vadd.f32 %v1240, %v1272
          %v1305 = vadd.f32 %v1241, %v1273
          %v1306 = vadd.f32 %v1242, %v1274
          %v1307 = vadd.f32 %v1243, %v1275
          %v1308 = vadd.f32 %v1244, %v1276
          %v1309 = vadd.f32 %v1245, %v1277
          %v1310 = vadd.f32 %v1246, %v1278
          %v1311 = vadd.f32 %v1247, %v1279
          %v1312 = vadd.f32 %v1248, %v1280
          %v1313 = vadd.f32 %v1249, %v1281
          %v1314 = vadd.f32 %v1250, %v1282
          %v1315 = vadd.f32 %v1251, %v1283
          %v1316 = vadd.f32 %v1252, %v1284
          %v1317 = vadd.f32 %v1253, %v1285
          %v1318 = vadd.f32 %v1254, %v1286
          %v1319 = vadd.f32 %v1255, %v1287
          %v1320 = vadd.f32 %v1256, %v1288
          %v1321 = vadd.f32 %v1257, %v1289
          %v1322 = vadd.f32 %v1258, %v1290
          %v1323 = vadd.f32 %v1259, %v1291
          %v1324 = vadd.f32 %v1260, %v1292
          %v1325 = vadd.f32 %v1261, %v1293
          %v1326 = vadd.f32 %v1262, %v1294
          %v1327 = vadd.f32 %v1263, %v1295
          %v1328 = vadd.f32 %v1264, %v1296
          %1329 = vst [vmem:[%s325] sm:$0xff] %v1297
          %1330 = vst [vmem:[%s325 + $0x8] sm:$0xff] %v1298
          %1331 = vst [vmem:[%s325 + $0x10] sm:$0xff] %v1299
          %1332 = vst [vmem:[%s325 + $0x18] sm:$0xff] %v1300
          %1333 = vst [vmem:[%s325 + $0x20] sm:$0xff] %v1301
          %1334 = vst [vmem:[%s325 + $0x28] sm:$0xff] %v1302
          %1335 = vst [vmem:[%s325 + $0x30] sm:$0xff] %v1303
          %1336 = vst [vmem:[%s325 + $0x38] sm:$0xff] %v1304
          %1337 = vst [vmem:[%s325 + $0x40] sm:$0xff] %v1305
          %1338 = vst [vmem:[%s325 + $0x48] sm:$0xff] %v1306
          %1339 = vst [vmem:[%s325 + $0x50] sm:$0xff] %v1307
          %1340 = vst [vmem:[%s325 + $0x58] sm:$0xff] %v1308
          %1341 = vst [vmem:[%s325 + $0x60] sm:$0xff] %v1309
          %1342 = vst [vmem:[%s325 + $0x68] sm:$0xff] %v1310
          %1343 = vst [vmem:[%s325 + $0x70] sm:$0xff] %v1311
          %1344 = vst [vmem:[%s325 + $0x78] sm:$0xff] %v1312
          %1345 = vst [vmem:[%s325 + $0x80] sm:$0xff] %v1313
          %1346 = vst [vmem:[%s325 + $0x88] sm:$0xff] %v1314
          %1347 = vst [vmem:[%s325 + $0x90] sm:$0xff] %v1315
          %1348 = vst [vmem:[%s325 + $0x98] sm:$0xff] %v1316
          %1349 = vst [vmem:[%s325 + $0xa0] sm:$0xff] %v1317
          %1350 = vst [vmem:[%s325 + $0xa8] sm:$0xff] %v1318
          %1351 = vst [vmem:[%s325 + $0xb0] sm:$0xff] %v1319
          %1352 = vst [vmem:[%s325 + $0xb8] sm:$0xff] %v1320
          %1353 = vst [vmem:[%s325 + $0xc0] sm:$0xff] %v1321
          %1354 = vst [vmem:[%s325 + $0xc8] sm:$0xff] %v1322
          %1355 = vst [vmem:[%s325 + $0xd0] sm:$0xff] %v1323
          %1356 = vst [vmem:[%s325 + $0xd8] sm:$0xff] %v1324
          %1357 = vst [vmem:[%s325 + $0xe0] sm:$0xff] %v1325
          %1358 = vst [vmem:[%s325 + $0xe8] sm:$0xff] %v1326
          %1359 = vst [vmem:[%s325 + $0xf0] sm:$0xff] %v1327
          %1360 = vst [vmem:[%s325 + $0xf8] sm:$0xff] %v1328
        $region64: #{tpu_custom_call.1} parent=39 // pred_fallthru
          _
        %s1361 = sand.u32 %s160, 1
        %s1362 = scalar_lea.sflag [#allocation4], %s1361
        %s1363 = sand.u32 %s160, 1
        %s1364 = smul.addr %s1363, 256
        %s1365 = scalar_lea.vmem [#allocation9], %s1364
        // Predicated region
        $region65: #{tpu_custom_call.1} parent=39 // pred_check
          %p1366 = pneg %p170
        $region66: #{tpu_custom_call.1} parent=39 // pred_check_branch
          %1368 = sbr.rel (%p1366) target = $region68
        $region67: #{tpu_custom_call.1} parent=39 // pred_region
          %s1369 = smul.u32 32, %s27
          %s1371 = ssub.s32 4096, 4096
          %1372 = vsyncadd %s1362, %s1371
          %s1373 = smul.addr %s1369, 128
          %s1374 = scalar_lea.hbm %s5, %s1373
          %s1375 = sshll.u32 %s1365, 4
          %s1376 = int_to_ptr.vmem [resolvable:$true] %s1375
          %1381 = dma.vmem_to_hbm [thread:$0]  %s1376, 4096, %s1374, %s1362, 128, 128, 8
        $region68: #{tpu_custom_call.1} parent=39 // pred_fallthru
          _
      $region40: #{tpu_custom_call.1} parent=5 // pred_fallthru
        _
      %p1382 = scmp.le.s32.totalorder 2, %s18
      // Predicated region
      $region69: #{tpu_custom_call.1} parent=5 // pred_check
        %p1383 = pneg %p1382
      $region70: #{tpu_custom_call.1} parent=5 // pred_check_branch
        %1385 = sbr.rel (%p1383) target = $region72
      $region71: #{tpu_custom_call.1} parent=5 // pred_region
        %s1386 = ssub.s32 %s18, 2
        // Predicated region
        $region73: #{tpu_custom_call.1} parent=71 // pred_check
          %p1387 = pneg %p176
        $region74: #{tpu_custom_call.1} parent=71 // pred_check_branch
          %1389 = sbr.rel (%p1387) target = $region76
        $region75: #{tpu_custom_call.1} parent=71 // pred_region
          %s1390 = sand.u32 %s161, 1
          %s1391 = scalar_lea.sflag [#allocation4], %s1390
          %s1392 = sand.u32 %s161, 1
          %s1393 = smul.addr %s1392, 256
          %s1394 = scalar_lea.vmem [#allocation9], %s1393
          %1395 = dma.done %s1391, 4096
        $region76: #{tpu_custom_call.1} parent=71 // pred_fallthru
          _
      $region72: #{tpu_custom_call.1} parent=5 // pred_fallthru
        _
    $region6: #{tpu_custom_call.1} parent=1 // loop_footer
      %s22 = sadd.s32 1, %s18
    $region7: #{tpu_custom_call.1} parent=1 // loop_footer_branch
      %17 = sbr.rel target = $region3
    $region8: #{tpu_custom_call.1} parent=1 // loop_exit
      _
    %1396 = vsyncpa [#allocation3], 1
    %s1397 = scalar_lea.sflag [#allocation3], 1
    %1398 = vsyncpa %s1397, 1
    %1399 = vsyncpa [#allocation6], 1
    %1400 = vsyncpa [#allocation4], 1
    %s1401 = scalar_lea.sflag [#allocation4], 1
    %1402 = vsyncpa %s1401, 1

</llo_original>
